<compile_context>
chip_gen: v7x
topology: tpu7x:2x2x1
jax: 0.10.0
libtpu: 0.0.40
codegen_flags: <defaults>
</compile_context>

<pallas_src>
import functools

import jax
import jax.numpy as jnp
from jax.experimental import pallas as pl
from jax.experimental.pallas import tpu as pltpu


_TABLE_CAP_BYTES = 4 * 1024 * 1024      # resident-table cap (v7x 64 MiB/TC aware)
_VMEM_BUDGET_BYTES = 40 * 1024 * 1024   # table + per-tile working set budget


def _round_up(x, m):
    return (x + m - 1) // m * m


def _onehot_gather_kernel(ids_ref, table_ref, out_ref, *, use_highest):
    # ids_ref  : VMEM (T, 1)  int32 token ids for this tile
    # table_ref: VMEM (Vp, D) concatenated [frozen; raw] table, resident (single copy)
    # out_ref  : VMEM (T, D)
    ids = ids_ref[...]                                   # (T, 1)
    tokens = out_ref.shape[0]
    vocab = table_ref.shape[0]

    # Single one-hot over the concatenated vocabulary -> single MXU dot.
    iota = jax.lax.broadcasted_iota(jnp.int32, (tokens, vocab), 1)
    onehot = (ids == iota).astype(table_ref.dtype)       # (T, Vp), exact 0/1

    precision = jax.lax.Precision.HIGHEST if use_highest else None
    acc = jnp.dot(onehot, table_ref[...],
                  preferred_element_type=jnp.float32,
                  precision=precision)
    out_ref[...] = acc.astype(out_ref.dtype)


def prefrozen_embedding_lookup(input_ids, frozen_w, raw_w, *, block_tokens=512):
    """Equivalent of PrefrozenEmbeddings.forward (max_norm=None)."""
    B, S = input_ids.shape
    Vf, D = frozen_w.shape
    Vr, Dr = raw_w.shape
    assert D == Dr, "embedding dims must match"
    assert frozen_w.dtype == raw_w.dtype, "table dtypes must match"

    # torch.cat([frozen, raw], dim=0), padded with zero rows to a multiple of 8
    # sublanes so the resident VMEM block is aligned.
    V = Vf + Vr
    Vp = _round_up(V, 8)
    table = jnp.concatenate([frozen_w, raw_w], axis=0)
    if Vp != V:
        table = jnp.pad(table, ((0, Vp - V), (0, 0)))

    itemsize = jnp.dtype(table.dtype).itemsize
    table_bytes = Vp * D * itemsize
    assert table_bytes <= _TABLE_CAP_BYTES, (
        "embedding tables too large for the VMEM-resident one-hot kernel path; "
        "a DMA-gather path is required (see TODO)")

    N = B * S
    # Tokens per tile: multiple of 8 (sublane), default 512 (multiple of the
    # 256/128 MXU M granularity); shrink if per-tile intermediates blow VMEM.
    T = min(block_tokens, _round_up(N, 8))

    def _tile_bytes(t):
        onehot_b = t * Vp * itemsize   # (T, Vp) one-hot in table dtype
        iota_b = t * Vp * 4            # int32 iota / compare temporaries
        acc_b = t * D * 4              # f32 MXU accumulator
        ids_b = t * 4                  # int32 id tile
        out_b = t * D * itemsize
        return 2 * (ids_b + out_b) + onehot_b + iota_b + acc_b  # ids/out double-buffered

    while T > 8 and table_bytes + _tile_bytes(T) > _VMEM_BUDGET_BYTES:
        T = max(8, T // 2)
    assert table_bytes + _tile_bytes(T) <= _VMEM_BUDGET_BYTES, (
        "per-tile VMEM working set too large even at the minimum tile size")

    N_pad = _round_up(N, T)
    num_tiles = N_pad // T

    flat_ids = input_ids.reshape(N).astype(jnp.int32)
    if N_pad != N:
        flat_ids = jnp.pad(flat_ids, (0, N_pad - N))  # pad with id 0 (in range)
    ids2d = flat_ids.reshape(N_pad, 1)

    # f32 tables -> HIGHEST keeps the gather bit-exact; bf16/f16 tables are
    # exact with a single-pass dot (one-hot selects exactly one product).
    use_highest = jnp.dtype(table.dtype) == jnp.dtype(jnp.float32)

    # Explicit scoped-VMEM limit: our accounted working set + generous margin,
    # clamped to the v7x per-TensorCore physical VMEM.
    vmem_limit = min(64 * 1024 * 1024,
                     max(32 * 1024 * 1024,
                         table_bytes + _tile_bytes(T) + 8 * 1024 * 1024))

    flops = 2 * N_pad * Vp * D
    bytes_accessed = N_pad * 4 + table_bytes + N_pad * D * itemsize

    out = pl.pallas_call(
        functools.partial(_onehot_gather_kernel, use_highest=use_highest),
        out_shape=jax.ShapeDtypeStruct((N_pad, D), table.dtype),
        grid_spec=pltpu.PrefetchScalarGridSpec(
            num_scalar_prefetch=0,
            grid=(num_tiles,),
            in_specs=[
                # token id tile, pipelined over the grid
                pl.BlockSpec((T, 1), lambda i: (i, 0)),
                # whole concatenated table resident in VMEM, copied in once,
                # single buffer (not part of the double-buffered pipeline)
                pl.BlockSpec(memory_space=pltpu.MemorySpace.VMEM),
            ],
            out_specs=pl.BlockSpec((T, D), lambda i: (i, 0)),
        ),
        compiler_params=pltpu.CompilerParams(
            dimension_semantics=("parallel",),
            vmem_limit_bytes=vmem_limit),
        cost_estimate=pl.CostEstimate(
            flops=flops, transcendentals=0, bytes_accessed=bytes_accessed),
    )(ids2d, table)

    return out[:N].reshape(B, S, D)


if __name__ == "__main__":
    # Synthetic, deterministic parameter setup (mirrors __init__ shapes):
    #   frozen = nn.Embedding(NUM_FROZEN, D, padding_idx=0, max_norm=None)
    #   raw    = nn.Embedding(NUM_EXTRA,  D, padding_idx=0, max_norm=None)
    NUM_FROZEN = 16
    NUM_EXTRA = 8
    D = 128
    B, S = 2, 8

    key = jax.random.PRNGKey(0)
    k_frozen, k_raw, k_ids = jax.random.split(key, 3)

    frozen_w = jax.random.normal(k_frozen, (NUM_FROZEN, D), dtype=jnp.float32)
    frozen_w = frozen_w.at[0].set(0.0)  # padding_idx=0 row zeroed at init
    raw_w = jax.random.normal(k_raw, (NUM_EXTRA, D), dtype=jnp.float32)
    raw_w = raw_w.at[0].set(0.0)        # padding_idx=0 row zeroed at init

    input_ids = jax.random.randint(
        k_ids, (B, S), minval=0, maxval=NUM_FROZEN + NUM_EXTRA, dtype=jnp.int32)

    out = prefrozen_embedding_lookup(input_ids, frozen_w, raw_w)
    out = jax.block_until_ready(out)

    # Reference: concat + gather, exactly like torch.cat + F.embedding forward.
    ref = jnp.concatenate([frozen_w, raw_w], axis=0)[input_ids]
    assert out.shape == (B, S, D), out.shape
    assert jnp.allclose(out, ref, atol=1e-6, rtol=1e-6), (
        "Pallas gather mismatch vs reference")

    print("KERNEL_OK")
</pallas_src>

<mosaic_0001>
module attributes {stable_mosaic.version = 11 : i64} {
  func.func @_onehot_gather_kernel(%arg0: i32, %arg1: memref<16x1xi32, #tpu.memory_space<vmem>>, %arg2: memref<24x128xf32, #tpu.memory_space<vmem>>, %arg3: memref<16x128xf32, #tpu.memory_space<vmem>>) attributes {dimension_semantics = [#tpu.dimension_semantics<parallel>], iteration_bounds = array<i64: 1>, scalar_prefetch = 0 : i64, scratch_operands = 0 : i64, tpu.core_type = #tpu.core_type<tc>, window_params = [{transform_indices = @transform_0, window_bounds = array<i64: 16, 1>}, {pipeline_mode = #tpu.pipeline_mode<synchronous>, transform_indices = @transform_1, window_bounds = array<i64: 24, 128>}, {transform_indices = @transform_2, window_bounds = array<i64: 16, 128>}]} {
    %c0 = arith.constant 0 : index
    %c0_0 = arith.constant 0 : index
    %0 = vector.load %arg1[%c0, %c0_0] : memref<16x1xi32, #tpu.memory_space<vmem>>, vector<16x1xi32>
    %1 = tpu.iota {dimensions = array<i32: 1>} : vector<16x24xi32>
    %2 = vector.broadcast %0 : vector<16x1xi32> to vector<16x24xi32>
    %3 = arith.cmpi eq, %2, %1 : vector<16x24xi32>
    %4 = arith.extui %3 : vector<16x24xi1> to vector<16x24xi32>
    %5 = arith.sitofp %4 : vector<16x24xi32> to vector<16x24xf32>
    %c0_1 = arith.constant 0 : index
    %c0_2 = arith.constant 0 : index
    %6 = vector.load %arg2[%c0_1, %c0_2] : memref<24x128xf32, #tpu.memory_space<vmem>>, vector<24x128xf32>
    %cst = arith.constant dense<0.000000e+00> : vector<16x128xf32>
    %7 = tpu.matmul %5, %6, %cst {dimension_numbers = #tpu.dot_dimension_numbers<[1], [0], [0], [1], [0, 0, 1, 1], [], []>, precision = #tpu.contract_precision<fp32>} : vector<16x24xf32>, vector<24x128xf32>, vector<16x128xf32> -> vector<16x128xf32>
    %c0_3 = arith.constant 0 : index
    %c0_4 = arith.constant 0 : index
    %8 = vector.load %arg3[%c0_3, %c0_4] : memref<16x128xf32, #tpu.memory_space<vmem>>, vector<16x128xf32>
    tpu.vector_store %arg3[%c0_3, %c0_4], %7 {strides = array<i32>} : memref<16x128xf32, #tpu.memory_space<vmem>>, vector<16x128xf32>,
    return
  }
  func.func @transform_0(%arg0: i32) -> (i32, i32) {
    %c0_i32 = arith.constant 0 : i32
    %c0_i32_0 = arith.constant 0 : i32
    return %arg0, %c0_i32 : i32, i32
  }
  func.func @transform_1(%arg0: i32) -> (i32, i32) {
    %c0_i32 = arith.constant 0 : i32
    %c0_i32_0 = arith.constant 0 : i32
    %c0_i32_1 = arith.constant 0 : i32
    return %c0_i32, %c0_i32_0 : i32, i32
  }
  func.func @transform_2(%arg0: i32) -> (i32, i32) {
    %c0_i32 = arith.constant 0 : i32
    %c0_i32_0 = arith.constant 0 : i32
    return %arg0, %c0_i32 : i32, i32
  }
}

</mosaic_0001>

<llo_original>
// kernel: tpu_custom_call.1
$region0: #{tpu_custom_call.1}
  #allocation0 [shape = 'u32[]', space=smem, size = 0x4, offset = 0x4, fixed_abs, tag = 'smem constant byte address 0x4 - core index']
  #allocation1 [shape = 'u32[144,128]{1,0:T(1,128)}', space=vmem, size = 0x12000, scoped, tag = 'internal scratch']
  %s0 = inlined_call_operand.vmem [shape: s32[16,1], index: 0, kind: input, shape index: {}]
  %s1 = inlined_call_operand.hbm [shape: f32[24,128], index: 1, kind: input, shape index: {}]
  %s2 = inlined_call_operand.hbm [shape: f32[16,128], index: 2, kind: output, shape index: {}]
  %s3 = sld [smem:[#allocation0]]
  $region22: #{tpu_custom_call.1} parent=0
    _
  %s5 = ssub.s32 1, %s3
  %s6 = scalar_select 0, %s5, %s3
  $region1: #{tpu_custom_call.1} parent=0
    #allocation2 [shape = 'u8[12288]{0}', space=vmem, size = 0x3000, scoped, tag = 'input window, operand 1, single buffered']
    #allocation3 [shape = 's32[1]{0}', space=sflag, size = 0x4, scoped, tag = 'scoped memory for tpu_custom_call.1']
    #allocation4 [shape = 's32[1]{0}', space=sflag, size = 0x4, scoped, tag = 'scoped memory for tpu_custom_call.1']
    #allocation5 [shape = 'u8[8192]{0}', space=vmem, size = 0x2000, scoped, tag = 'output window, operand 0, single buffered']
    %7 = vsyncpa [#allocation3], 0
    %8 = vsyncpa [#allocation4], 0
    // Predicated region
    $region2: #{tpu_custom_call.1} parent=1 // pred_check
      _
    $region3: #{tpu_custom_call.1} parent=1 // pred_check_branch
      %10 = sbr.rel (0) target = $region5
    $region4: #{tpu_custom_call.1} parent=1 // pred_region
      _
    $region5: #{tpu_custom_call.1} parent=1 // pred_fallthru
      _
    // Predicated region
    $region6: #{tpu_custom_call.1} parent=1 // pred_check
      _
    $region7: #{tpu_custom_call.1} parent=1 // pred_check_branch
      %12 = sbr.rel (0) target = $region9
    $region8: #{tpu_custom_call.1} parent=1 // pred_region
      %s14 = ssub.s32 384, 384
      %15 = vsyncadd [#allocation3], %s14
      %s16 = sshll.u32 [#allocation2], 4
      %s17 = int_to_ptr.vmem [resolvable:$true] %s16
      %22 = dma.hbm_to_vmem [thread:$0]  %s1, 384, %s17, [#allocation3], 128, 128, 8
    $region9: #{tpu_custom_call.1} parent=1 // pred_fallthru
      _
    // Predicated region
    $region10: #{tpu_custom_call.1} parent=1 // pred_check
      _
    $region11: #{tpu_custom_call.1} parent=1 // pred_check_branch
      %24 = sbr.rel (0) target = $region13
    $region12: #{tpu_custom_call.1} parent=1 // pred_region
      %25 = dma.done [#allocation3], 384
    $region13: #{tpu_custom_call.1} parent=1 // pred_fallthru
      _
    %v26 = vld [vmem:[%s0] sm:$0xff]
    %v27 = vld [vmem:[%s0 + $0x8] sm:$0xff]
    %v28 = vlaneseq
    %v29 = vand.u32 %v28, 127
    %30 = vset.pattern.permute.xlu0 0
    %31 = vperm.xlu0 %30, %v26
    %v32 = vpop.permute.xlu0 %31
    %33 = vset.pattern.permute.xlu0 0
    %34 = vperm.xlu0 %33, %v27
    %v35 = vpop.permute.xlu0 %34
    %vm36 = vcmp.eq.s32.totalorder %v32, %v29
    %vm37 = vcmp.eq.s32.totalorder %v35, %v29
    %v38 = vsel %vm36, 1, 0
    %v39 = vsel %vm37, 1, 0
    %v40 = vcvt.s32.f32 %v38
    %v41 = vcvt.s32.f32 %v39
    %v42 = vld [vmem:[#allocation2] sm:$0xff]
    %v43 = vld [vmem:[#allocation2 + $0x8] sm:$0xff]
    %v44 = vld [vmem:[#allocation2 + $0x10] sm:$0xff]
    %vm45 = vcmask 195584
    %v47 = vsel %vm45, %v40, 0
    %v50 = vsel %vm45, %v41, 0
    %52 = vmatprep.subr.mxu0 0.0
    %v53 = vand.u32 %v42, 4294901760
    %54 = vmatpush1.msra.mxu0 %v53
    %55 = vmatprep.subr.mxu0 0.0
    %v56 = vand.u32 %v43, 4294901760
    %57 = vmatpush1.msra.mxu0 %v56
    %58 = vmatprep.subr.mxu0 0.0
    %v59 = vand.u32 %v44, 4294901760
    %60 = vmatpush1.msra.mxu0 %v59
    %61 = vmatprep.subr.mxu0 0.0
    %62 = vmatpush1.msra.mxu0 0.0
    %63 = vmatprep.subr.mxu0 0.0
    %64 = vmatpush1.msra.mxu0 0.0
    %65 = vmatprep.subr.mxu0 0.0
    %66 = vmatpush1.msra.mxu0 0.0
    %67 = vmatprep.subr.mxu0 0.0
    %68 = vmatpush1.msra.mxu0 0.0
    %69 = vmatprep.subr.mxu0 0.0
    %70 = vmatpush1.msra.mxu0 0.0
    %71 = vmatprep.subr.mxu0 0.0
    %72 = vmatpush1.msra.mxu0 0.0
    %73 = vmatprep.subr.mxu0 0.0
    %74 = vmatpush1.msra.mxu0 0.0
    %75 = vmatprep.subr.mxu0 0.0
    %76 = vmatpush1.msra.mxu0 0.0
    %77 = vmatprep.subr.mxu0 0.0
    %78 = vmatpush1.msra.mxu0 0.0
    %79 = vmatprep.subr.mxu0 0.0
    %80 = vmatpush1.msra.mxu0 0.0
    %81 = vmatprep.subr.mxu0 0.0
    %82 = vmatpush1.msra.mxu0 0.0
    %83 = vmatprep.subr.mxu0 0.0
    %84 = vmatpush1.msra.mxu0 0.0
    %85 = vmatprep.subr.mxu0 0.0
    %86 = vmatpush1.msra.mxu0 0.0
    %87 = vmatprep.subr.mxu0 0.0
    %88 = vmatpush1.msra.mxu0 0.0
    %89 = vmatprep.subr.mxu0 0.0
    %90 = vmatpush1.msra.mxu0 0.0
    %91 = vmatprep.subr.mxu0 0.0
    %92 = vmatpush1.msra.mxu0 0.0
    %93 = vmatprep.subr.mxu0 0.0
    %94 = vmatpush1.msra.mxu0 0.0
    %95 = vmatprep.subr.mxu0 0.0
    %96 = vmatpush1.msra.mxu0 0.0
    %97 = vmatprep.subr.mxu0 0.0
    %98 = vmatpush1.msra.mxu0 0.0
    %99 = vmatprep.subr.mxu0 0.0
    %100 = vmatpush1.msra.mxu0 0.0
    %101 = vmatprep.subr.mxu0 0.0
    %102 = vmatpush1.msra.mxu0 0.0
    %103 = vmatprep.subr.mxu0 0.0
    %104 = vmatpush1.msra.mxu0 0.0
    %105 = vmatprep.subr.mxu0 0.0
    %106 = vmatpush1.msra.mxu0 0.0
    %107 = vmatprep.subr.mxu0 0.0
    %108 = vmatpush1.msra.mxu0 0.0
    %109 = vmatprep.subr.mxu0 0.0
    %110 = vmatpush1.msra.mxu0 0.0
    %111 = vmatprep.subr.mxu0 0.0
    %112 = vmatpush1.msra.mxu0 0.0
    %113 = vmatprep.subr.mxu0 0.0
    %114 = vmatpush1.msra.mxu0 0.0
    %115 = vmatprep.subr.mxu0 0.0
    %116 = vmatpush1.msra.mxu0 0.0
    %117 = vmatprep.subr.mxu0 0.0
    %118 = vmatpush1.msra.mxu0 0.0
    %119 = vmatprep.mubr.f32.mxu0 0.0
    %v120 = vand.u32 %v47, 4294901760
    %v121 = vsub.f32 %v47, %v120
    %v122 = vand.u32 %v121, 4294901760
    %v123 = vsub.f32 %v121, %v122
    %v124 = vand.u32 %v123, 4294901760
    %125 = vmatmul.mubr.f32.gmra.mrb[0].mxu0 %v124
    %v126 = vpop.f32.mrb[0].mxu0
    %v127 = vadd.f32 0.0, %v126
    %v128 = vpop.f32.mrb[0].mxu0
    %129 = vmatprep.mubr.f32.mxu0 0.0
    %v130 = vand.u32 %v50, 4294901760
    %v131 = vsub.f32 %v50, %v130
    %v132 = vand.u32 %v131, 4294901760
    %v133 = vsub.f32 %v131, %v132
    %v134 = vand.u32 %v133, 4294901760
    %135 = vmatmul.mubr.f32.gmra.mrb[0].mxu0 %v134
    %v136 = vpop.f32.mrb[0].mxu0
    %v137 = vadd.f32 0.0, %v136
    %v138 = vpop.f32.mrb[0].mxu0
    %139 = vdwg.mxu0
    %140 = vmatprep.subr.mxu0 0.0
    %v141 = vand.u32 %v42, 4294901760
    %v142 = vsub.f32 %v42, %v141
    %v143 = vand.u32 %v142, 4294901760
    %v144 = vsub.f32 %v142, %v143
    %v145 = vand.u32 %v144, 4294901760
    %146 = vmatpush1.msra.mxu0 %v145
    %147 = vmatprep.subr.mxu0 0.0
    %v148 = vand.u32 %v43, 4294901760
    %v149 = vsub.f32 %v43, %v148
    %v150 = vand.u32 %v149, 4294901760
    %v151 = vsub.f32 %v149, %v150
    %v152 = vand.u32 %v151, 4294901760
    %153 = vmatpush1.msra.mxu0 %v152
    %154 = vmatprep.subr.mxu0 0.0
    %v155 = vand.u32 %v44, 4294901760
    %v156 = vsub.f32 %v44, %v155
    %v157 = vand.u32 %v156, 4294901760
    %v158 = vsub.f32 %v156, %v157
    %v159 = vand.u32 %v158, 4294901760
    %160 = vmatpush1.msra.mxu0 %v159
    %161 = vmatprep.subr.mxu0 0.0
    %162 = vmatpush1.msra.mxu0 0.0
    %163 = vmatprep.subr.mxu0 0.0
    %164 = vmatpush1.msra.mxu0 0.0
    %165 = vmatprep.subr.mxu0 0.0
    %166 = vmatpush1.msra.mxu0 0.0
    %167 = vmatprep.subr.mxu0 0.0
    %168 = vmatpush1.msra.mxu0 0.0
    %169 = vmatprep.subr.mxu0 0.0
    %170 = vmatpush1.msra.mxu0 0.0
    %171 = vmatprep.subr.mxu0 0.0
    %172 = vmatpush1.msra.mxu0 0.0
    %173 = vmatprep.subr.mxu0 0.0
    %174 = vmatpush1.msra.mxu0 0.0
    %175 = vmatprep.subr.mxu0 0.0
    %176 = vmatpush1.msra.mxu0 0.0
    %177 = vmatprep.subr.mxu0 0.0
    %178 = vmatpush1.msra.mxu0 0.0
    %179 = vmatprep.subr.mxu0 0.0
    %180 = vmatpush1.msra.mxu0 0.0
    %181 = vmatprep.subr.mxu0 0.0
    %182 = vmatpush1.msra.mxu0 0.0
    %183 = vmatprep.subr.mxu0 0.0
    %184 = vmatpush1.msra.mxu0 0.0
    %185 = vmatprep.subr.mxu0 0.0
    %186 = vmatpush1.msra.mxu0 0.0
    %187 = vmatprep.subr.mxu0 0.0
    %188 = vmatpush1.msra.mxu0 0.0
    %189 = vmatprep.subr.mxu0 0.0
    %190 = vmatpush1.msra.mxu0 0.0
    %191 = vmatprep.subr.mxu0 0.0
    %192 = vmatpush1.msra.mxu0 0.0
    %193 = vmatprep.subr.mxu0 0.0
    %194 = vmatpush1.msra.mxu0 0.0
    %195 = vmatprep.subr.mxu0 0.0
    %196 = vmatpush1.msra.mxu0 0.0
    %197 = vmatprep.subr.mxu0 0.0
    %198 = vmatpush1.msra.mxu0 0.0
    %199 = vmatprep.subr.mxu0 0.0
    %200 = vmatpush1.msra.mxu0 0.0
    %201 = vmatprep.subr.mxu0 0.0
    %202 = vmatpush1.msra.mxu0 0.0
    %203 = vmatprep.subr.mxu0 0.0
    %204 = vmatpush1.msra.mxu0 0.0
    %205 = vmatprep.subr.mxu0 0.0
    %206 = vmatpush1.msra.mxu0 0.0
    %207 = vmatprep.subr.mxu0 0.0
    %208 = vmatpush1.msra.mxu0 0.0
    %209 = vmatprep.subr.mxu0 0.0
    %210 = vmatpush1.msra.mxu0 0.0
    %211 = vmatprep.subr.mxu0 0.0
    %212 = vmatpush1.msra.mxu0 0.0
    %213 = vmatprep.subr.mxu0 0.0
    %214 = vmatpush1.msra.mxu0 0.0
    %215 = vmatprep.subr.mxu0 0.0
    %216 = vmatpush1.msra.mxu0 0.0
    %217 = vmatprep.subr.mxu0 0.0
    %218 = vmatpush1.msra.mxu0 0.0
    %219 = vmatprep.mubr.f32.mxu0 0.0
    %v220 = vand.u32 %v47, 4294901760
    %221 = vmatmul.mubr.f32.gmra.mrb[0].mxu0 %v220
    %v222 = vpop.f32.mrb[0].mxu0
    %v223 = vadd.f32 %v127, %v222
    %v224 = vpop.f32.mrb[0].mxu0
    %225 = vmatprep.mubr.f32.mxu0 0.0
    %v226 = vand.u32 %v50, 4294901760
    %227 = vmatmul.mubr.f32.gmra.mrb[0].mxu0 %v226
    %v228 = vpop.f32.mrb[0].mxu0
    %v229 = vadd.f32 %v137, %v228
    %v230 = vpop.f32.mrb[0].mxu0
    %231 = vdwg.mxu0
    %232 = vmatprep.subr.mxu0 0.0
    %v233 = vand.u32 %v42, 4294901760
    %v234 = vsub.f32 %v42, %v233
    %235 = vmatpush1.msra.mxu0 %v234
    %236 = vmatprep.subr.mxu0 0.0
    %v237 = vand.u32 %v43, 4294901760
    %v238 = vsub.f32 %v43, %v237
    %239 = vmatpush1.msra.mxu0 %v238
    %240 = vmatprep.subr.mxu0 0.0
    %v241 = vand.u32 %v44, 4294901760
    %v242 = vsub.f32 %v44, %v241
    %243 = vmatpush1.msra.mxu0 %v242
    %244 = vmatprep.subr.mxu0 0.0
    %245 = vmatpush1.msra.mxu0 0.0
    %246 = vmatprep.subr.mxu0 0.0
    %247 = vmatpush1.msra.mxu0 0.0
    %248 = vmatprep.subr.mxu0 0.0
    %249 = vmatpush1.msra.mxu0 0.0
    %250 = vmatprep.subr.mxu0 0.0
    %251 = vmatpush1.msra.mxu0 0.0
    %252 = vmatprep.subr.mxu0 0.0
    %253 = vmatpush1.msra.mxu0 0.0
    %254 = vmatprep.subr.mxu0 0.0
    %255 = vmatpush1.msra.mxu0 0.0
    %256 = vmatprep.subr.mxu0 0.0
    %257 = vmatpush1.msra.mxu0 0.0
    %258 = vmatprep.subr.mxu0 0.0
    %259 = vmatpush1.msra.mxu0 0.0
    %260 = vmatprep.subr.mxu0 0.0
    %261 = vmatpush1.msra.mxu0 0.0
    %262 = vmatprep.subr.mxu0 0.0
    %263 = vmatpush1.msra.mxu0 0.0
    %264 = vmatprep.subr.mxu0 0.0
    %265 = vmatpush1.msra.mxu0 0.0
    %266 = vmatprep.subr.mxu0 0.0
    %267 = vmatpush1.msra.mxu0 0.0
    %268 = vmatprep.subr.mxu0 0.0
    %269 = vmatpush1.msra.mxu0 0.0
    %270 = vmatprep.subr.mxu0 0.0
    %271 = vmatpush1.msra.mxu0 0.0
    %272 = vmatprep.subr.mxu0 0.0
    %273 = vmatpush1.msra.mxu0 0.0
    %274 = vmatprep.subr.mxu0 0.0
    %275 = vmatpush1.msra.mxu0 0.0
    %276 = vmatprep.subr.mxu0 0.0
    %277 = vmatpush1.msra.mxu0 0.0
    %278 = vmatprep.subr.mxu0 0.0
    %279 = vmatpush1.msra.mxu0 0.0
    %280 = vmatprep.subr.mxu0 0.0
    %281 = vmatpush1.msra.mxu0 0.0
    %282 = vmatprep.subr.mxu0 0.0
    %283 = vmatpush1.msra.mxu0 0.0
    %284 = vmatprep.subr.mxu0 0.0
    %285 = vmatpush1.msra.mxu0 0.0
    %286 = vmatprep.subr.mxu0 0.0
    %287 = vmatpush1.msra.mxu0 0.0
    %288 = vmatprep.subr.mxu0 0.0
    %289 = vmatpush1.msra.mxu0 0.0
    %290 = vmatprep.subr.mxu0 0.0
    %291 = vmatpush1.msra.mxu0 0.0
    %292 = vmatprep.subr.mxu0 0.0
    %293 = vmatpush1.msra.mxu0 0.0
    %294 = vmatprep.subr.mxu0 0.0
    %295 = vmatpush1.msra.mxu0 0.0
    %296 = vmatprep.subr.mxu0 0.0
    %297 = vmatpush1.msra.mxu0 0.0
    %298 = vmatprep.subr.mxu0 0.0
    %299 = vmatpush1.msra.mxu0 0.0
    %300 = vmatprep.subr.mxu0 0.0
    %301 = vmatpush1.msra.mxu0 0.0
    %302 = vmatprep.mubr.f32.mxu0 0.0
    %v303 = vand.u32 %v47, 4294901760
    %v304 = vsub.f32 %v47, %v303
    %305 = vmatmul.mubr.f32.gmra.mrb[0].mxu0 %v304
    %v306 = vpop.f32.mrb[0].mxu0
    %v307 = vadd.f32 %v223, %v306
    %v308 = vpop.f32.mrb[0].mxu0
    %309 = vmatprep.mubr.f32.mxu0 0.0
    %v310 = vand.u32 %v50, 4294901760
    %v311 = vsub.f32 %v50, %v310
    %312 = vmatmul.mubr.f32.gmra.mrb[0].mxu0 %v311
    %v313 = vpop.f32.mrb[0].mxu0
    %v314 = vadd.f32 %v229, %v313
    %v315 = vpop.f32.mrb[0].mxu0
    %316 = vdwg.mxu0
    %317 = vmatprep.subr.mxu0 0.0
    %v318 = vand.u32 %v42, 4294901760
    %319 = vmatpush1.msra.mxu0 %v318
    %320 = vmatprep.subr.mxu0 0.0
    %v321 = vand.u32 %v43, 4294901760
    %322 = vmatpush1.msra.mxu0 %v321
    %323 = vmatprep.subr.mxu0 0.0
    %v324 = vand.u32 %v44, 4294901760
    %325 = vmatpush1.msra.mxu0 %v324
    %326 = vmatprep.subr.mxu0 0.0
    %327 = vmatpush1.msra.mxu0 0.0
    %328 = vmatprep.subr.mxu0 0.0
    %329 = vmatpush1.msra.mxu0 0.0
    %330 = vmatprep.subr.mxu0 0.0
    %331 = vmatpush1.msra.mxu0 0.0
    %332 = vmatprep.subr.mxu0 0.0
    %333 = vmatpush1.msra.mxu0 0.0
    %334 = vmatprep.subr.mxu0 0.0
    %335 = vmatpush1.msra.mxu0 0.0
    %336 = vmatprep.subr.mxu0 0.0
    %337 = vmatpush1.msra.mxu0 0.0
    %338 = vmatprep.subr.mxu0 0.0
    %339 = vmatpush1.msra.mxu0 0.0
    %340 = vmatprep.subr.mxu0 0.0
    %341 = vmatpush1.msra.mxu0 0.0
    %342 = vmatprep.subr.mxu0 0.0
    %343 = vmatpush1.msra.mxu0 0.0
    %344 = vmatprep.subr.mxu0 0.0
    %345 = vmatpush1.msra.mxu0 0.0
    %346 = vmatprep.subr.mxu0 0.0
    %347 = vmatpush1.msra.mxu0 0.0
    %348 = vmatprep.subr.mxu0 0.0
    %349 = vmatpush1.msra.mxu0 0.0
    %350 = vmatprep.subr.mxu0 0.0
    %351 = vmatpush1.msra.mxu0 0.0
    %352 = vmatprep.subr.mxu0 0.0
    %353 = vmatpush1.msra.mxu0 0.0
    %354 = vmatprep.subr.mxu0 0.0
    %355 = vmatpush1.msra.mxu0 0.0
    %356 = vmatprep.subr.mxu0 0.0
    %357 = vmatpush1.msra.mxu0 0.0
    %358 = vmatprep.subr.mxu0 0.0
    %359 = vmatpush1.msra.mxu0 0.0
    %360 = vmatprep.subr.mxu0 0.0
    %361 = vmatpush1.msra.mxu0 0.0
    %362 = vmatprep.subr.mxu0 0.0
    %363 = vmatpush1.msra.mxu0 0.0
    %364 = vmatprep.subr.mxu0 0.0
    %365 = vmatpush1.msra.mxu0 0.0
    %366 = vmatprep.subr.mxu0 0.0
    %367 = vmatpush1.msra.mxu0 0.0
    %368 = vmatprep.subr.mxu0 0.0
    %369 = vmatpush1.msra.mxu0 0.0
    %370 = vmatprep.subr.mxu0 0.0
    %371 = vmatpush1.msra.mxu0 0.0
    %372 = vmatprep.subr.mxu0 0.0
    %373 = vmatpush1.msra.mxu0 0.0
    %374 = vmatprep.subr.mxu0 0.0
    %375 = vmatpush1.msra.mxu0 0.0
    %376 = vmatprep.subr.mxu0 0.0
    %377 = vmatpush1.msra.mxu0 0.0
    %378 = vmatprep.subr.mxu0 0.0
    %379 = vmatpush1.msra.mxu0 0.0
    %380 = vmatprep.subr.mxu0 0.0
    %381 = vmatpush1.msra.mxu0 0.0
    %382 = vmatprep.subr.mxu0 0.0
    %383 = vmatpush1.msra.mxu0 0.0
    %384 = vmatprep.mubr.f32.mxu0 0.0
    %v385 = vand.u32 %v47, 4294901760
    %v386 = vsub.f32 %v47, %v385
    %v387 = vand.u32 %v386, 4294901760
    %388 = vmatmul.mubr.f32.gmra.mrb[0].mxu0 %v387
    %v389 = vpop.f32.mrb[0].mxu0
    %v390 = vadd.f32 %v307, %v389
    %v391 = vpop.f32.mrb[0].mxu0
    %392 = vmatprep.mubr.f32.mxu0 0.0
    %v393 = vand.u32 %v50, 4294901760
    %v394 = vsub.f32 %v50, %v393
    %v395 = vand.u32 %v394, 4294901760
    %396 = vmatmul.mubr.f32.gmra.mrb[0].mxu0 %v395
    %v397 = vpop.f32.mrb[0].mxu0
    %v398 = vadd.f32 %v314, %v397
    %v399 = vpop.f32.mrb[0].mxu0
    %400 = vdwg.mxu0
    %401 = vmatprep.subr.mxu0 0.0
    %v402 = vand.u32 %v42, 4294901760
    %v403 = vsub.f32 %v42, %v402
    %v404 = vand.u32 %v403, 4294901760
    %405 = vmatpush1.msra.mxu0 %v404
    %406 = vmatprep.subr.mxu0 0.0
    %v407 = vand.u32 %v43, 4294901760
    %v408 = vsub.f32 %v43, %v407
    %v409 = vand.u32 %v408, 4294901760
    %410 = vmatpush1.msra.mxu0 %v409
    %411 = vmatprep.subr.mxu0 0.0
    %v412 = vand.u32 %v44, 4294901760
    %v413 = vsub.f32 %v44, %v412
    %v414 = vand.u32 %v413, 4294901760
    %415 = vmatpush1.msra.mxu0 %v414
    %416 = vmatprep.subr.mxu0 0.0
    %417 = vmatpush1.msra.mxu0 0.0
    %418 = vmatprep.subr.mxu0 0.0
    %419 = vmatpush1.msra.mxu0 0.0
    %420 = vmatprep.subr.mxu0 0.0
    %421 = vmatpush1.msra.mxu0 0.0
    %422 = vmatprep.subr.mxu0 0.0
    %423 = vmatpush1.msra.mxu0 0.0
    %424 = vmatprep.subr.mxu0 0.0
    %425 = vmatpush1.msra.mxu0 0.0
    %426 = vmatprep.subr.mxu0 0.0
    %427 = vmatpush1.msra.mxu0 0.0
    %428 = vmatprep.subr.mxu0 0.0
    %429 = vmatpush1.msra.mxu0 0.0
    %430 = vmatprep.subr.mxu0 0.0
    %431 = vmatpush1.msra.mxu0 0.0
    %432 = vmatprep.subr.mxu0 0.0
    %433 = vmatpush1.msra.mxu0 0.0
    %434 = vmatprep.subr.mxu0 0.0
    %435 = vmatpush1.msra.mxu0 0.0
    %436 = vmatprep.subr.mxu0 0.0
    %437 = vmatpush1.msra.mxu0 0.0
    %438 = vmatprep.subr.mxu0 0.0
    %439 = vmatpush1.msra.mxu0 0.0
    %440 = vmatprep.subr.mxu0 0.0
    %441 = vmatpush1.msra.mxu0 0.0
    %442 = vmatprep.subr.mxu0 0.0
    %443 = vmatpush1.msra.mxu0 0.0
    %444 = vmatprep.subr.mxu0 0.0
    %445 = vmatpush1.msra.mxu0 0.0
    %446 = vmatprep.subr.mxu0 0.0
    %447 = vmatpush1.msra.mxu0 0.0
    %448 = vmatprep.subr.mxu0 0.0
    %449 = vmatpush1.msra.mxu0 0.0
    %450 = vmatprep.subr.mxu0 0.0
    %451 = vmatpush1.msra.mxu0 0.0
    %452 = vmatprep.subr.mxu0 0.0
    %453 = vmatpush1.msra.mxu0 0.0
    %454 = vmatprep.subr.mxu0 0.0
    %455 = vmatpush1.msra.mxu0 0.0
    %456 = vmatprep.subr.mxu0 0.0
    %457 = vmatpush1.msra.mxu0 0.0
    %458 = vmatprep.subr.mxu0 0.0
    %459 = vmatpush1.msra.mxu0 0.0
    %460 = vmatprep.subr.mxu0 0.0
    %461 = vmatpush1.msra.mxu0 0.0
    %462 = vmatprep.subr.mxu0 0.0
    %463 = vmatpush1.msra.mxu0 0.0
    %464 = vmatprep.subr.mxu0 0.0
    %465 = vmatpush1.msra.mxu0 0.0
    %466 = vmatprep.subr.mxu0 0.0
    %467 = vmatpush1.msra.mxu0 0.0
    %468 = vmatprep.subr.mxu0 0.0
    %469 = vmatpush1.msra.mxu0 0.0
    %470 = vmatprep.subr.mxu0 0.0
    %471 = vmatpush1.msra.mxu0 0.0
    %472 = vmatprep.subr.mxu0 0.0
    %473 = vmatpush1.msra.mxu0 0.0
    %474 = vmatprep.mubr.f32.mxu0 0.0
    %v475 = vand.u32 %v47, 4294901760
    %476 = vmatmul.mubr.f32.gmra.mrb[0].mxu0 %v475
    %v477 = vpop.f32.mrb[0].mxu0
    %v478 = vadd.f32 %v390, %v477
    %v479 = vpop.f32.mrb[0].mxu0
    %480 = vmatprep.mubr.f32.mxu0 0.0
    %v481 = vand.u32 %v50, 4294901760
    %482 = vmatmul.mubr.f32.gmra.mrb[0].mxu0 %v481
    %v483 = vpop.f32.mrb[0].mxu0
    %v484 = vadd.f32 %v398, %v483
    %v485 = vpop.f32.mrb[0].mxu0
    %486 = vdwg.mxu0
    %487 = vmatprep.subr.mxu0 0.0
    %v488 = vand.u32 %v42, 4294901760
    %489 = vmatpush1.msra.mxu0 %v488
    %490 = vmatprep.subr.mxu0 0.0
    %v491 = vand.u32 %v43, 4294901760
    %492 = vmatpush1.msra.mxu0 %v491
    %493 = vmatprep.subr.mxu0 0.0
    %v494 = vand.u32 %v44, 4294901760
    %495 = vmatpush1.msra.mxu0 %v494
    %496 = vmatprep.subr.mxu0 0.0
    %497 = vmatpush1.msra.mxu0 0.0
    %498 = vmatprep.subr.mxu0 0.0
    %499 = vmatpush1.msra.mxu0 0.0
    %500 = vmatprep.subr.mxu0 0.0
    %501 = vmatpush1.msra.mxu0 0.0
    %502 = vmatprep.subr.mxu0 0.0
    %503 = vmatpush1.msra.mxu0 0.0
    %504 = vmatprep.subr.mxu0 0.0
    %505 = vmatpush1.msra.mxu0 0.0
    %506 = vmatprep.subr.mxu0 0.0
    %507 = vmatpush1.msra.mxu0 0.0
    %508 = vmatprep.subr.mxu0 0.0
    %509 = vmatpush1.msra.mxu0 0.0
    %510 = vmatprep.subr.mxu0 0.0
    %511 = vmatpush1.msra.mxu0 0.0
    %512 = vmatprep.subr.mxu0 0.0
    %513 = vmatpush1.msra.mxu0 0.0
    %514 = vmatprep.subr.mxu0 0.0
    %515 = vmatpush1.msra.mxu0 0.0
    %516 = vmatprep.subr.mxu0 0.0
    %517 = vmatpush1.msra.mxu0 0.0
    %518 = vmatprep.subr.mxu0 0.0
    %519 = vmatpush1.msra.mxu0 0.0
    %520 = vmatprep.subr.mxu0 0.0
    %521 = vmatpush1.msra.mxu0 0.0
    %522 = vmatprep.subr.mxu0 0.0
    %523 = vmatpush1.msra.mxu0 0.0
    %524 = vmatprep.subr.mxu0 0.0
    %525 = vmatpush1.msra.mxu0 0.0
    %526 = vmatprep.subr.mxu0 0.0
    %527 = vmatpush1.msra.mxu0 0.0
    %528 = vmatprep.subr.mxu0 0.0
    %529 = vmatpush1.msra.mxu0 0.0
    %530 = vmatprep.subr.mxu0 0.0
    %531 = vmatpush1.msra.mxu0 0.0
    %532 = vmatprep.subr.mxu0 0.0
    %533 = vmatpush1.msra.mxu0 0.0
    %534 = vmatprep.subr.mxu0 0.0
    %535 = vmatpush1.msra.mxu0 0.0
    %536 = vmatprep.subr.mxu0 0.0
    %537 = vmatpush1.msra.mxu0 0.0
    %538 = vmatprep.subr.mxu0 0.0
    %539 = vmatpush1.msra.mxu0 0.0
    %540 = vmatprep.subr.mxu0 0.0
    %541 = vmatpush1.msra.mxu0 0.0
    %542 = vmatprep.subr.mxu0 0.0
    %543 = vmatpush1.msra.mxu0 0.0
    %544 = vmatprep.subr.mxu0 0.0
    %545 = vmatpush1.msra.mxu0 0.0
    %546 = vmatprep.subr.mxu0 0.0
    %547 = vmatpush1.msra.mxu0 0.0
    %548 = vmatprep.subr.mxu0 0.0
    %549 = vmatpush1.msra.mxu0 0.0
    %550 = vmatprep.subr.mxu0 0.0
    %551 = vmatpush1.msra.mxu0 0.0
    %552 = vmatprep.subr.mxu0 0.0
    %553 = vmatpush1.msra.mxu0 0.0
    %554 = vmatprep.mubr.f32.mxu0 0.0
    %v555 = vand.u32 %v47, 4294901760
    %556 = vmatmul.mubr.f32.gmra.mrb[0].mxu0 %v555
    %v557 = vpop.f32.mrb[0].mxu0
    %v558 = vadd.f32 %v478, %v557
    %v559 = vpop.f32.mrb[0].mxu0
    %560 = vmatprep.mubr.f32.mxu0 0.0
    %v561 = vand.u32 %v50, 4294901760
    %562 = vmatmul.mubr.f32.gmra.mrb[0].mxu0 %v561
    %v563 = vpop.f32.mrb[0].mxu0
    %v564 = vadd.f32 %v484, %v563
    %v565 = vpop.f32.mrb[0].mxu0
    %566 = vdwg.mxu0
    %567 = vst [vmem:[#allocation5] sm:$0xff] %v558
    %568 = vst [vmem:[#allocation5 + $0x8] sm:$0xff] %v564
    // Predicated region
    $region14: #{tpu_custom_call.1} parent=1 // pred_check
      _
    $region15: #{tpu_custom_call.1} parent=1 // pred_check_branch
      %570 = sbr.rel (0) target = $region17
    $region16: #{tpu_custom_call.1} parent=1 // pred_region
      %s572 = ssub.s32 256, 256
      %573 = vsyncadd [#allocation4], %s572
      %s574 = sshll.u32 [#allocation5], 4
      %s575 = int_to_ptr.vmem [resolvable:$true] %s574
      %580 = dma.vmem_to_hbm [thread:$0]  %s575, 256, %s2, [#allocation4], 128, 128, 8
    $region17: #{tpu_custom_call.1} parent=1 // pred_fallthru
      _
    // Predicated region
    $region18: #{tpu_custom_call.1} parent=1 // pred_check
      _
    $region19: #{tpu_custom_call.1} parent=1 // pred_check_branch
      %582 = sbr.rel (0) target = $region21
    $region20: #{tpu_custom_call.1} parent=1 // pred_region
      %583 = dma.done [#allocation4], 256
    $region21: #{tpu_custom_call.1} parent=1 // pred_fallthru
      _
    %584 = vsyncpa [#allocation3], 1
    %585 = vsyncpa [#allocation4], 1

</llo_original>
